<compile_context>
chip_gen: v7x
topology: tpu7x:2x2x1
jax: 0.10.0
libtpu: 0.0.40
codegen_flags: <defaults>
</compile_context>

<pallas_src>
import jax
import jax.numpy as jnp
from jax.experimental import pallas as pl
from jax.experimental.pallas import tpu as pltpu


def _linear_relu_sigmoid_kernel(x_ref, w_ref, o_ref):
    # Fused: matmul (MXU, f32 accumulation) + ReLU (VPU) + sigmoid (EUP exp).
    y = jnp.dot(x_ref[...], w_ref[...], preferred_element_type=jnp.float32)
    y = jnp.maximum(y, 0.0)                      # clamp(min=0)
    o_ref[...] = jax.nn.sigmoid(y).astype(o_ref.dtype)


def _vmem_ceiling_bytes():
    """Generation-aware VMEM ceiling: physical capacity minus ~16 MiB headroom."""
    try:
        cap = int(pltpu.get_tpu_info().vmem_capacity_bytes)
    except Exception:
        cap = 64 << 20                           # conservative (v7x per-TC VMEM)
    return max(cap - (16 << 20), 32 << 20)


def simple_continuous_net(x, w, *, tile_m=256, tile_n=512,
                          compute_dtype=jnp.bfloat16,
                          max_x_resident_bytes=16 << 20):
    """x: (B, F) float32, w: (F, F) float32 (already-transposed Linear weight)."""
    B, F = x.shape
    assert w.shape == (F, F)
    out_dtype = x.dtype

    it = jnp.dtype(compute_dtype).itemsize       # matmul-operand itemsize
    oit = jnp.dtype(out_dtype).itemsize          # output itemsize
    flops = 2 * B * F * F
    transc = B * F                               # one exp per output element

    # Cast operands once in the wrapper: halves the w HBM stream (bf16) and
    # feeds the MXU its native dtype; accumulation/epilogue stay f32.
    xc = x.astype(compute_dtype)
    wc = w.astype(compute_dtype)

    ceiling = _vmem_ceiling_bytes()
    tm = min(B, tile_m)
    tn = min(F, tile_n)

    # ---------- Path 1: whole problem in one VMEM block (toy sizes). ----------
    # Launch/overhead bound anyway; on v7x a 1-block grid uses one TC, which is
    # irrelevant at these sizes.
    whole_bytes = (B * F + F * F) * it + B * F * oit
    if B <= tm and F <= tn and whole_bytes + (4 << 20) <= ceiling:
        cost = pl.CostEstimate(flops=flops, transcendentals=transc,
                               bytes_accessed=whole_bytes)
        return pl.pallas_call(
            _linear_relu_sigmoid_kernel,
            out_shape=jax.ShapeDtypeStruct((B, F), out_dtype),
            in_specs=[
                pl.BlockSpec(memory_space=pltpu.MemorySpace.VMEM),
                pl.BlockSpec(memory_space=pltpu.MemorySpace.VMEM),
            ],
            out_specs=pl.BlockSpec(memory_space=pltpu.MemorySpace.VMEM),
            cost_estimate=cost,
        )(xc, wc)

    # ---------- Path 2: x-resident — x DMAed exactly once, w streamed once. ----------
    x_bytes = B * F * it

    def resident_need(tn_):
        # x buffers + double-buffered (F, tn) weight tile + double-buffered output tile.
        return 2 * x_bytes + 2 * F * tn_ * it + 2 * B * tn_ * oit

    tn_res = tn
    while tn_res > 128 and resident_need(tn_res) + (4 << 20) > ceiling:
        tn_res //= 2

    if x_bytes <= max_x_resident_bytes and resident_need(tn_res) + (4 << 20) <= ceiling:
        tn = tn_res
        n_n = pl.cdiv(F, tn)
        bytes_accessed = (B * F + F * F) * it + B * F * oit   # x read once
        cost = pl.CostEstimate(flops=flops, transcendentals=transc,
                               bytes_accessed=bytes_accessed)
        vmem_limit = int(min(resident_need(tn) + (8 << 20), ceiling))
        return pl.pallas_call(
            _linear_relu_sigmoid_kernel,
            out_shape=jax.ShapeDtypeStruct((B, F), out_dtype),
            grid=(n_n,),
            in_specs=[
                # x: full-array block, constant block index => resident, 1 HBM read.
                pl.BlockSpec((B, F), lambda j: (0, 0)),
                # w: lane-dense column tile streamed exactly once.
                pl.BlockSpec((F, tn), lambda j: (0, j)),
            ],
            out_specs=pl.BlockSpec((B, tn), lambda j: (0, j)),
            compiler_params=pltpu.CompilerParams(
                dimension_semantics=("parallel",),
                vmem_limit_bytes=vmem_limit,
            ),
            cost_estimate=cost,
        )(xc, wc)

    # ---------- Path 3: general tiled fallback (x too large to keep resident). ----------
    # Grid = (N tiles, M tiles): batch innermost so the big (F, tn) weight tile
    # keeps the same block index across inner iterations and stays VMEM-resident
    # (w read once; x re-read n_n times — the cheaper operand at large B).
    def tiled_need(tm_, tn_):
        return 2 * (tm_ * F + F * tn_) * it + 2 * tm_ * tn_ * oit

    while tn > 128 and tiled_need(tm, tn) + (4 << 20) > ceiling:
        tn //= 2
    while tm > 8 and tiled_need(tm, tn) + (4 << 20) > ceiling:
        tm //= 2

    n_m = pl.cdiv(B, tm)
    n_n = pl.cdiv(F, tn)
    bytes_accessed = (n_n * B * F + F * F) * it + B * F * oit
    cost = pl.CostEstimate(flops=flops, transcendentals=transc,
                           bytes_accessed=bytes_accessed)
    vmem_limit = int(min(tiled_need(tm, tn) + (8 << 20), ceiling))

    return pl.pallas_call(
        _linear_relu_sigmoid_kernel,
        out_shape=jax.ShapeDtypeStruct((B, F), out_dtype),
        grid=(n_n, n_m),
        in_specs=[
            # x tile: (tm, F) — full reduction dim per block.
            pl.BlockSpec((tm, F), lambda j, i: (i, 0)),
            # w tile: (F, tn) — constant across the inner (i) loop => resident.
            pl.BlockSpec((F, tn), lambda j, i: (0, j)),
        ],
        out_specs=pl.BlockSpec((tm, tn), lambda j, i: (i, j)),
        compiler_params=pltpu.CompilerParams(
            dimension_semantics=("parallel", "parallel"),
            vmem_limit_bytes=vmem_limit,
        ),
        cost_estimate=cost,
    )(xc, wc)


def reference(x, w):
    y = x @ w
    y = jnp.maximum(y, 0.0)
    return jax.nn.sigmoid(y)


if __name__ == "__main__":
    key = jax.random.PRNGKey(0)
    kx1, kw1, kx2, kw2, kx3, kw3 = jax.random.split(key, 6)

    # Case 1: the module's natural toy size
    # (input_size = input_length * alphabet_size, e.g. 32 * 4 = 128).
    # Exact f32 path, single VMEM block.
    B1, F1 = 8, 128
    x1 = jax.random.normal(kx1, (B1, F1), dtype=jnp.float32)
    w1 = (jax.random.uniform(kw1, (F1, F1), dtype=jnp.float32) - 0.5) * 0.2
    out1 = jax.block_until_ready(
        simple_continuous_net(x1, w1, compute_dtype=jnp.float32))
    assert out1.shape == (B1, F1)
    assert jnp.allclose(out1, reference(x1, w1), atol=1e-5, rtol=1e-5), \
        "single-block path mismatch vs reference"

    # Case 2: x-resident path with bf16 operands (grid over weight-column tiles).
    B2, F2 = 256, 1024
    x2 = jax.random.normal(kx2, (B2, F2), dtype=jnp.float32)
    w2 = (jax.random.uniform(kw2, (F2, F2), dtype=jnp.float32) - 0.5) * 0.05
    out2 = jax.block_until_ready(simple_continuous_net(x2, w2))
    assert out2.shape == (B2, F2)
    assert jnp.allclose(out2, reference(x2, w2), atol=2e-2, rtol=2e-2), \
        "x-resident path mismatch vs reference (bf16 tolerance)"

    # Case 3: exercise the general tiled fallback (force x out of residency).
    B3, F3 = 64, 256
    x3 = jax.random.normal(kx3, (B3, F3), dtype=jnp.float32)
    w3 = (jax.random.uniform(kw3, (F3, F3), dtype=jnp.float32) - 0.5) * 0.1
    out3 = jax.block_until_ready(
        simple_continuous_net(x3, w3, tile_m=32, tile_n=128,
                              max_x_resident_bytes=0))
    assert out3.shape == (B3, F3)
    assert jnp.allclose(out3, reference(x3, w3), atol=2e-2, rtol=2e-2), \
        "tiled fallback path mismatch vs reference (bf16 tolerance)"

    print("KERNEL_OK")
</pallas_src>

<mosaic_0001>
module attributes {stable_mosaic.version = 11 : i64} {
  func.func @_linear_relu_sigmoid_kernel(%arg0: memref<8x128xf32, #tpu.memory_space<vmem>>, %arg1: memref<128x128xf32, #tpu.memory_space<vmem>>, %arg2: memref<8x128xf32, #tpu.memory_space<vmem>>) attributes {dimension_semantics = [], scalar_prefetch = 0 : i64, scratch_operands = 0 : i64, tpu.core_type = #tpu.core_type<tc>} {
    %c0 = arith.constant 0 : index
    %c0_0 = arith.constant 0 : index
    %0 = vector.load %arg0[%c0, %c0_0] : memref<8x128xf32, #tpu.memory_space<vmem>>, vector<8x128xf32>
    %c0_1 = arith.constant 0 : index
    %c0_2 = arith.constant 0 : index
    %1 = vector.load %arg1[%c0_1, %c0_2] : memref<128x128xf32, #tpu.memory_space<vmem>>, vector<128x128xf32>
    %cst = arith.constant dense<0.000000e+00> : vector<8x128xf32>
    %2 = tpu.matmul %0, %1, %cst {dimension_numbers = #tpu.dot_dimension_numbers<[1], [0], [0], [1], [0, 0, 1, 1], [], []>} : vector<8x128xf32>, vector<128x128xf32>, vector<8x128xf32> -> vector<8x128xf32>
    %cst_3 = arith.constant 0.000000e+00 : f32
    %3 = vector.broadcast %cst_3 : f32 to vector<8x128xf32>
    %4 = arith.maximumf %2, %3 : vector<8x128xf32>
    %5 = arith.negf %4 : vector<8x128xf32>
    %6 = math.exp %5 : vector<8x128xf32>
    %cst_4 = arith.constant 1.000000e+00 : f32
    %7 = vector.broadcast %cst_4 : f32 to vector<8x128xf32>
    %8 = arith.addf %7, %6 : vector<8x128xf32>
    %9 = arith.divf %7, %8 : vector<8x128xf32>
    %c0_5 = arith.constant 0 : index
    %c0_6 = arith.constant 0 : index
    %10 = vector.load %arg2[%c0_5, %c0_6] : memref<8x128xf32, #tpu.memory_space<vmem>>, vector<8x128xf32>
    tpu.vector_store %arg2[%c0_5, %c0_6], %9 {strides = array<i32>} : memref<8x128xf32, #tpu.memory_space<vmem>>, vector<8x128xf32>,
    return
  }
}

</mosaic_0001>

<llo_original>
// kernel: tpu_custom_call.1
$region0: #{tpu_custom_call.1}
  #allocation0 [shape = 'u32[]', space=smem, size = 0x4, offset = 0x4, fixed_abs, tag = 'smem constant byte address 0x4 - core index']
  #allocation1 [shape = 'u32[144,128]{1,0:T(1,128)}', space=vmem, size = 0x12000, scoped, tag = 'internal scratch']
  %s0 = inlined_call_operand.hbm [shape: f32[8,128], index: 0, kind: input, shape index: {}]
  %s1 = inlined_call_operand.hbm [shape: f32[128,128], index: 1, kind: input, shape index: {}]
  %s2 = inlined_call_operand.hbm [shape: f32[8,128], index: 2, kind: output, shape index: {}]
  %s3 = sld [smem:[#allocation0]]
  $region26: #{tpu_custom_call.1} parent=0
    _
  %s5 = ssub.s32 1, %s3
  %s6 = scalar_select 0, %s5, %s3
  $region1: #{tpu_custom_call.1} parent=0
    #allocation2 [shape = 'u8[4096]{0}', space=vmem, size = 0x1000, scoped, tag = 'input window, operand 0, single buffered']
    #allocation3 [shape = 's32[1]{0}', space=sflag, size = 0x4, scoped, tag = 'scoped memory for tpu_custom_call.1']
    #allocation4 [shape = 's32[1]{0}', space=sflag, size = 0x4, scoped, tag = 'scoped memory for tpu_custom_call.1']
    #allocation5 [shape = 'u8[65536]{0}', space=vmem, size = 0x10000, scoped, tag = 'input window, operand 1, single buffered']
    #allocation6 [shape = 's32[1]{0}', space=sflag, size = 0x4, scoped, tag = 'scoped memory for tpu_custom_call.1']
    #allocation7 [shape = 'u8[4096]{0}', space=vmem, size = 0x1000, scoped, tag = 'output window, operand 0, single buffered']
    %7 = vsyncpa [#allocation3], 0
    %8 = vsyncpa [#allocation6], 0
    %9 = vsyncpa [#allocation4], 0
    // Predicated region
    $region2: #{tpu_custom_call.1} parent=1 // pred_check
      _
    $region3: #{tpu_custom_call.1} parent=1 // pred_check_branch
      %11 = sbr.rel (0) target = $region5
    $region4: #{tpu_custom_call.1} parent=1 // pred_region
      %s13 = ssub.s32 128, 128
      %14 = vsyncadd [#allocation3], %s13
      %s16 = sshll.u32 [#allocation2], 4
      %s17 = int_to_ptr.vmem [resolvable:$true] %s16
      %19 = dma.hbm_to_vmem [thread:$0]  %s0, 128, %s17, [#allocation3]
    $region5: #{tpu_custom_call.1} parent=1 // pred_fallthru
      _
    // Predicated region
    $region6: #{tpu_custom_call.1} parent=1 // pred_check
      _
    $region7: #{tpu_custom_call.1} parent=1 // pred_check_branch
      %21 = sbr.rel (0) target = $region9
    $region8: #{tpu_custom_call.1} parent=1 // pred_region
      %s23 = ssub.s32 2048, 2048
      %24 = vsyncadd [#allocation6], %s23
      %s25 = sshll.u32 [#allocation5], 4
      %s26 = int_to_ptr.vmem [resolvable:$true] %s25
      %31 = dma.hbm_to_vmem [thread:$0]  %s1, 2048, %s26, [#allocation6], 128, 128, 8
    $region9: #{tpu_custom_call.1} parent=1 // pred_fallthru
      _
    // Predicated region
    $region10: #{tpu_custom_call.1} parent=1 // pred_check
      _
    $region11: #{tpu_custom_call.1} parent=1 // pred_check_branch
      %33 = sbr.rel (0) target = $region13
    $region12: #{tpu_custom_call.1} parent=1 // pred_region
      %34 = dma.done [#allocation3], 128
    $region13: #{tpu_custom_call.1} parent=1 // pred_fallthru
      _
    // Predicated region
    $region14: #{tpu_custom_call.1} parent=1 // pred_check
      _
    $region15: #{tpu_custom_call.1} parent=1 // pred_check_branch
      %36 = sbr.rel (0) target = $region17
    $region16: #{tpu_custom_call.1} parent=1 // pred_region
      %37 = dma.done [#allocation6], 2048
    $region17: #{tpu_custom_call.1} parent=1 // pred_fallthru
      _
    %v38 = vld [vmem:[#allocation2] sm:$0xff]
    %v39 = vld [vmem:[#allocation5] sm:$0xff]
    %v40 = vld [vmem:[#allocation5 + $0x8] sm:$0xff]
    %v41 = vld [vmem:[#allocation5 + $0x10] sm:$0xff]
    %v42 = vld [vmem:[#allocation5 + $0x18] sm:$0xff]
    %v43 = vld [vmem:[#allocation5 + $0x20] sm:$0xff]
    %v44 = vld [vmem:[#allocation5 + $0x28] sm:$0xff]
    %v45 = vld [vmem:[#allocation5 + $0x30] sm:$0xff]
    %v46 = vld [vmem:[#allocation5 + $0x38] sm:$0xff]
    %v47 = vld [vmem:[#allocation5 + $0x40] sm:$0xff]
    %v48 = vld [vmem:[#allocation5 + $0x48] sm:$0xff]
    %v49 = vld [vmem:[#allocation5 + $0x50] sm:$0xff]
    %v50 = vld [vmem:[#allocation5 + $0x58] sm:$0xff]
    %v51 = vld [vmem:[#allocation5 + $0x60] sm:$0xff]
    %v52 = vld [vmem:[#allocation5 + $0x68] sm:$0xff]
    %v53 = vld [vmem:[#allocation5 + $0x70] sm:$0xff]
    %v54 = vld [vmem:[#allocation5 + $0x78] sm:$0xff]
    %55 = vmatprep.subr.mxu0 0.0
    %56 = vmatpush1.msra.mxu0 %v39
    %57 = vmatprep.subr.mxu0 0.0
    %58 = vmatpush1.msra.mxu0 %v40
    %59 = vmatprep.subr.mxu0 0.0
    %60 = vmatpush1.msra.mxu0 %v41
    %61 = vmatprep.subr.mxu0 0.0
    %62 = vmatpush1.msra.mxu0 %v42
    %63 = vmatprep.subr.mxu0 0.0
    %64 = vmatpush1.msra.mxu0 %v43
    %65 = vmatprep.subr.mxu0 0.0
    %66 = vmatpush1.msra.mxu0 %v44
    %67 = vmatprep.subr.mxu0 0.0
    %68 = vmatpush1.msra.mxu0 %v45
    %69 = vmatprep.subr.mxu0 0.0
    %70 = vmatpush1.msra.mxu0 %v46
    %71 = vmatprep.subr.mxu0 0.0
    %72 = vmatpush1.msra.mxu0 %v47
    %73 = vmatprep.subr.mxu0 0.0
    %74 = vmatpush1.msra.mxu0 %v48
    %75 = vmatprep.subr.mxu0 0.0
    %76 = vmatpush1.msra.mxu0 %v49
    %77 = vmatprep.subr.mxu0 0.0
    %78 = vmatpush1.msra.mxu0 %v50
    %79 = vmatprep.subr.mxu0 0.0
    %80 = vmatpush1.msra.mxu0 %v51
    %81 = vmatprep.subr.mxu0 0.0
    %82 = vmatpush1.msra.mxu0 %v52
    %83 = vmatprep.subr.mxu0 0.0
    %84 = vmatpush1.msra.mxu0 %v53
    %85 = vmatprep.subr.mxu0 0.0
    %86 = vmatpush1.msra.mxu0 %v54
    %87 = vmatprep.subr.mxu0 0.0
    %88 = vmatpush1.msra.mxu0 0.0
    %89 = vmatprep.subr.mxu0 0.0
    %90 = vmatpush1.msra.mxu0 0.0
    %91 = vmatprep.subr.mxu0 0.0
    %92 = vmatpush1.msra.mxu0 0.0
    %93 = vmatprep.subr.mxu0 0.0
    %94 = vmatpush1.msra.mxu0 0.0
    %95 = vmatprep.subr.mxu0 0.0
    %96 = vmatpush1.msra.mxu0 0.0
    %97 = vmatprep.subr.mxu0 0.0
    %98 = vmatpush1.msra.mxu0 0.0
    %99 = vmatprep.subr.mxu0 0.0
    %100 = vmatpush1.msra.mxu0 0.0
    %101 = vmatprep.subr.mxu0 0.0
    %102 = vmatpush1.msra.mxu0 0.0
    %103 = vmatprep.subr.mxu0 0.0
    %104 = vmatpush1.msra.mxu0 0.0
    %105 = vmatprep.subr.mxu0 0.0
    %106 = vmatpush1.msra.mxu0 0.0
    %107 = vmatprep.subr.mxu0 0.0
    %108 = vmatpush1.msra.mxu0 0.0
    %109 = vmatprep.subr.mxu0 0.0
    %110 = vmatpush1.msra.mxu0 0.0
    %111 = vmatprep.subr.mxu0 0.0
    %112 = vmatpush1.msra.mxu0 0.0
    %113 = vmatprep.subr.mxu0 0.0
    %114 = vmatpush1.msra.mxu0 0.0
    %115 = vmatprep.subr.mxu0 0.0
    %116 = vmatpush1.msra.mxu0 0.0
    %117 = vmatprep.subr.mxu0 0.0
    %118 = vmatpush1.msra.mxu0 0.0
    %119 = vmatprep.mubr.f32.mxu0 0.0
    %120 = vmatmul.mubr.f32.gmra.mrb[0].mxu0 %v38
    %v121 = vpop.f32.mrb[0].mxu0
    %v122 = vadd.f32 0.0, %v121
    %v123 = vpop.f32.mrb[0].mxu0
    %124 = vdwg.mxu0
    %v125 = vmax.f32 %v122, 0.0
    %v126 = vxor.u32 %v125, 2147483648
    %v127 = vmul.f32 %v126, 1.442695
    %v128 = vpow.pop %v127
    %v129 = vadd.f32 %v128, 1.0
    %v130 = vrcp.pop %v129
    %v131 = vmul.f32 1.0, %v130
    %132 = vst [vmem:[#allocation7] sm:$0xff] %v131
    // Predicated region
    $region18: #{tpu_custom_call.1} parent=1 // pred_check
      _
    $region19: #{tpu_custom_call.1} parent=1 // pred_check_branch
      %134 = sbr.rel (0) target = $region21
    $region20: #{tpu_custom_call.1} parent=1 // pred_region
      %s136 = ssub.s32 128, 128
      %137 = vsyncadd [#allocation4], %s136
      %s139 = sshll.u32 [#allocation7], 4
      %s140 = int_to_ptr.vmem [resolvable:$true] %s139
      %142 = dma.vmem_to_hbm [thread:$0]  %s140, 128, %s2, [#allocation4]
    $region21: #{tpu_custom_call.1} parent=1 // pred_fallthru
      _
    // Predicated region
    $region22: #{tpu_custom_call.1} parent=1 // pred_check
      _
    $region23: #{tpu_custom_call.1} parent=1 // pred_check_branch
      %144 = sbr.rel (0) target = $region25
    $region24: #{tpu_custom_call.1} parent=1 // pred_region
      %145 = dma.done [#allocation4], 128
    $region25: #{tpu_custom_call.1} parent=1 // pred_fallthru
      _
    %146 = vsyncpa [#allocation3], 1
    %147 = vsyncpa [#allocation6], 1
    %148 = vsyncpa [#allocation4], 1

</llo_original>
